<compile_context>
chip_gen: v6e
topology: v6e:2x2x1
jax: 0.10.0
libtpu: 0.0.40
codegen_flags: <defaults>
</compile_context>

<pallas_src>
import jax
import jax.numpy as jnp
from jax.experimental import pallas as pl
from jax.experimental.pallas import tpu as pltpu


def rnncell_fused_kernel(xh_ref, w_ref, b_ref, out_ref):
    # xh_ref: (bm, I+H)   w_ref: (I+H, H)   b_ref: (1, H)   out_ref: (bm, H)
    acc = jnp.dot(xh_ref[...], w_ref[...], preferred_element_type=jnp.float32)
    acc = acc + b_ref[...]                      # (1, H) broadcasts over batch
    out_ref[...] = jnp.tanh(acc).astype(out_ref.dtype)


def prepare_rnncell_params(w_ih, w_hh, b_ih, b_hh):
    """One-time (loop-invariant) parameter prep — keep OUT of the hot path.

    w_ih: (H, I), w_hh: (H, H), b_ih/b_hh: (H,)
    Returns:
      w: (I+H, H)  stacked [W_ih^T ; W_hh^T]
      b: (1, H)    fused bias b_ih + b_hh
    """
    w = jnp.concatenate([jnp.transpose(w_ih), jnp.transpose(w_hh)], axis=0)
    b = (b_ih + b_hh).reshape(1, -1)
    return w, b


def rnncell_forward(x, h, w, b):
    """x: (B, I), h: (B, H), w: (I+H, H) prepared, b: (1, H) prepared."""
    batch, input_size = x.shape
    hidden_size = h.shape[1]
    k = input_size + hidden_size

    # Single fused operand for one MXU matmul (cheap concat, (B, I+H)).
    xh = jnp.concatenate([x, h], axis=1)

    # Batch (M) tiling: whole batch per block for small B; 256-row tiles
    # (MXU-width multiple on v6e/v7x) once B grows.
    bm = batch if batch <= 256 else 256
    grid = (pl.cdiv(batch, bm),)

    return pl.pallas_call(
        rnncell_fused_kernel,
        out_shape=jax.ShapeDtypeStruct((batch, hidden_size), x.dtype),
        grid=grid,
        in_specs=[
            # activations: tiled along batch
            pl.BlockSpec((bm, k), lambda i: (i, 0)),
            # stacked weight: constant index_map -> VMEM-resident across grid
            pl.BlockSpec((k, hidden_size), lambda i: (0, 0)),
            # fused bias: VMEM-resident
            pl.BlockSpec((1, hidden_size), lambda i: (0, 0)),
        ],
        out_specs=pl.BlockSpec((bm, hidden_size), lambda i: (i, 0)),
        compiler_params=pltpu.CompilerParams(
            dimension_semantics=("parallel",),
        ),
    )(xh, w, b)


if __name__ == "__main__":
    batch_size = 1
    hidden_size = 4
    input_size = 4

    key = jax.random.PRNGKey(0)
    k_x, k_wih, k_whh, k_bih, k_bhh = jax.random.split(key, 5)

    # Deterministic init mimicking PyTorch RNNCell default:
    # uniform(-1/sqrt(hidden_size), 1/sqrt(hidden_size))
    bound = 1.0 / jnp.sqrt(jnp.float32(hidden_size))
    w_ih = jax.random.uniform(k_wih, (hidden_size, input_size), jnp.float32, -bound, bound)
    w_hh = jax.random.uniform(k_whh, (hidden_size, hidden_size), jnp.float32, -bound, bound)
    b_ih = jax.random.uniform(k_bih, (hidden_size,), jnp.float32, -bound, bound)
    b_hh = jax.random.uniform(k_bhh, (hidden_size,), jnp.float32, -bound, bound)

    x = jax.random.normal(k_x, (batch_size, input_size), jnp.float32)
    h0 = jnp.zeros((batch_size, hidden_size), jnp.float32)   # Model.init_hidden()

    # One-time parameter preparation (hoisted out of the per-step path).
    w_prepared, b_prepared = prepare_rnncell_params(w_ih, w_hh, b_ih, b_hh)
    w_prepared = jax.block_until_ready(w_prepared)
    b_prepared = jax.block_until_ready(b_prepared)

    out = rnncell_forward(x, h0, w_prepared, b_prepared)
    out = jax.block_until_ready(out)

    # Cross-check against pure-JAX reference of the PyTorch formula.
    ref = jnp.tanh(x @ w_ih.T + b_ih + h0 @ w_hh.T + b_hh)
    assert jnp.allclose(out, ref, atol=1e-5, rtol=1e-5), (out, ref)

    print("KERNEL_OK")
</pallas_src>

<mosaic_0001>
module attributes {stable_mosaic.version = 11 : i64} {
  func.func @rnncell_fused_kernel(%arg0: i32, %arg1: memref<1x8xf32, #tpu.memory_space<vmem>>, %arg2: memref<8x4xf32, #tpu.memory_space<vmem>>, %arg3: memref<1x4xf32, #tpu.memory_space<vmem>>, %arg4: memref<1x4xf32, #tpu.memory_space<vmem>>) attributes {dimension_semantics = [#tpu.dimension_semantics<parallel>], iteration_bounds = array<i64: 1>, scalar_prefetch = 0 : i64, scratch_operands = 0 : i64, tpu.core_type = #tpu.core_type<tc>, window_params = [{transform_indices = @transform_0, window_bounds = array<i64: 1, 8>}, {pipeline_mode = #tpu.pipeline_mode<synchronous>, transform_indices = @transform_1, window_bounds = array<i64: 8, 4>}, {pipeline_mode = #tpu.pipeline_mode<synchronous>, transform_indices = @transform_2, window_bounds = array<i64: 1, 4>}, {transform_indices = @transform_3, window_bounds = array<i64: 1, 4>}]} {
    %c0 = arith.constant 0 : index
    %c0_0 = arith.constant 0 : index
    %0 = vector.load %arg1[%c0, %c0_0] : memref<1x8xf32, #tpu.memory_space<vmem>>, vector<1x8xf32>
    %c0_1 = arith.constant 0 : index
    %c0_2 = arith.constant 0 : index
    %1 = vector.load %arg2[%c0_1, %c0_2] : memref<8x4xf32, #tpu.memory_space<vmem>>, vector<8x4xf32>
    %cst = arith.constant dense<0.000000e+00> : vector<1x4xf32>
    %2 = tpu.matmul %0, %1, %cst {dimension_numbers = #tpu.dot_dimension_numbers<[1], [0], [0], [1], [0, 0, 1, 1], [], []>} : vector<1x8xf32>, vector<8x4xf32>, vector<1x4xf32> -> vector<1x4xf32>
    %c0_3 = arith.constant 0 : index
    %c0_4 = arith.constant 0 : index
    %3 = vector.load %arg3[%c0_3, %c0_4] : memref<1x4xf32, #tpu.memory_space<vmem>>, vector<1x4xf32>
    %4 = arith.addf %2, %3 : vector<1x4xf32>
    %5 = math.tanh %4 : vector<1x4xf32>
    %c0_5 = arith.constant 0 : index
    %c0_6 = arith.constant 0 : index
    %6 = vector.load %arg4[%c0_5, %c0_6] : memref<1x4xf32, #tpu.memory_space<vmem>>, vector<1x4xf32>
    tpu.vector_store %arg4[%c0_5, %c0_6], %5 {strides = array<i32>} : memref<1x4xf32, #tpu.memory_space<vmem>>, vector<1x4xf32>,
    return
  }
  func.func @transform_0(%arg0: i32) -> (i32, i32) {
    %c0_i32 = arith.constant 0 : i32
    %c0_i32_0 = arith.constant 0 : i32
    return %arg0, %c0_i32 : i32, i32
  }
  func.func @transform_1(%arg0: i32) -> (i32, i32) {
    %c0_i32 = arith.constant 0 : i32
    %c0_i32_0 = arith.constant 0 : i32
    %c0_i32_1 = arith.constant 0 : i32
    return %c0_i32, %c0_i32_0 : i32, i32
  }
  func.func @transform_2(%arg0: i32) -> (i32, i32) {
    %c0_i32 = arith.constant 0 : i32
    %c0_i32_0 = arith.constant 0 : i32
    %c0_i32_1 = arith.constant 0 : i32
    return %c0_i32, %c0_i32_0 : i32, i32
  }
  func.func @transform_3(%arg0: i32) -> (i32, i32) {
    %c0_i32 = arith.constant 0 : i32
    %c0_i32_0 = arith.constant 0 : i32
    return %arg0, %c0_i32 : i32, i32
  }
}

</mosaic_0001>

<llo_original>
// kernel: tpu_custom_call.1
$region0: #{tpu_custom_call.1}
  #allocation0 [shape = 'u32[]', space=smem, size = 0x4, offset = 0x4, fixed_abs, tag = 'smem constant byte address 0x4 - core index']
  #allocation1 [shape = 'u32[144,128]{1,0:T(1,128)}', space=vmem, size = 0x12000, scoped, tag = 'internal scratch']
  %s0 = inlined_call_operand.vmem [shape: f32[1,8], index: 0, kind: input, shape index: {}]
  %s1 = inlined_call_operand.vmem [shape: f32[8,4], index: 1, kind: input, shape index: {}]
  %s2 = inlined_call_operand.vmem [shape: f32[1,4], index: 2, kind: input, shape index: {}]
  %s3 = inlined_call_operand.hbm [shape: f32[1,4], index: 3, kind: output, shape index: {}]
  %s4 = sld [smem:[#allocation0]]
  $region22: #{tpu_custom_call.1} parent=0
    _
  %s6 = ssub.s32 1, %s4
  %s7 = scalar_select 0, %s6, %s4
  $region1: #{tpu_custom_call.1} parent=0
    #allocation2 [shape = 'u8[512]{0}', space=vmem, size = 0x400, scoped, tag = 'output window, operand 0, single buffered']
    #allocation3 [shape = 's32[1]{0}', space=sflag, size = 0x4, scoped, tag = 'scoped memory for tpu_custom_call.1']
    %8 = vsyncpa [#allocation3], 0
    // Predicated region
    $region2: #{tpu_custom_call.1} parent=1 // pred_check
      _
    $region3: #{tpu_custom_call.1} parent=1 // pred_check_branch
      %10 = sbr.rel (0) target = $region5
    $region4: #{tpu_custom_call.1} parent=1 // pred_region
      _
    $region5: #{tpu_custom_call.1} parent=1 // pred_fallthru
      _
    // Predicated region
    $region6: #{tpu_custom_call.1} parent=1 // pred_check
      _
    $region7: #{tpu_custom_call.1} parent=1 // pred_check_branch
      %12 = sbr.rel (0) target = $region9
    $region8: #{tpu_custom_call.1} parent=1 // pred_region
      _
    $region9: #{tpu_custom_call.1} parent=1 // pred_fallthru
      _
    // Predicated region
    $region10: #{tpu_custom_call.1} parent=1 // pred_check
      _
    $region11: #{tpu_custom_call.1} parent=1 // pred_check_branch
      %14 = sbr.rel (0) target = $region13
    $region12: #{tpu_custom_call.1} parent=1 // pred_region
      _
    $region13: #{tpu_custom_call.1} parent=1 // pred_fallthru
      _
    %v15 = vld [vmem:[%s0] sm:$0x1]
    %v16 = vld [vmem:[%s1] sm:$0xff]
    %v17 = vld [vmem:[%s2] sm:$0x1]
    %vm18 = vcmask 64512
    %v20 = vsel %vm18, %v15, 0
    %22 = vmatprep.subr.mxu0 0.0
    %23 = vmatpush1.msra.mxu0 0.0
    %24 = vmatprep.subr.mxu0 0.0
    %25 = vmatpush1.msra.mxu0 0.0
    %26 = vmatprep.subr.mxu0 0.0
    %27 = vmatpush1.msra.mxu0 0.0
    %28 = vmatprep.subr.mxu0 0.0
    %29 = vmatpush1.msra.mxu0 0.0
    %30 = vmatprep.subr.mxu0 0.0
    %31 = vmatpush1.msra.mxu0 0.0
    %32 = vmatprep.subr.mxu0 0.0
    %33 = vmatpush1.msra.mxu0 0.0
    %34 = vmatprep.subr.mxu0 0.0
    %35 = vmatpush1.msra.mxu0 0.0
    %36 = vmatprep.subr.mxu0 0.0
    %37 = vmatpush1.msra.mxu0 0.0
    %38 = vmatprep.subr.mxu0 0.0
    %39 = vmatpush1.msra.mxu0 0.0
    %40 = vmatprep.subr.mxu0 0.0
    %41 = vmatpush1.msra.mxu0 0.0
    %42 = vmatprep.subr.mxu0 0.0
    %43 = vmatpush1.msra.mxu0 0.0
    %44 = vmatprep.subr.mxu0 0.0
    %45 = vmatpush1.msra.mxu0 0.0
    %46 = vmatprep.subr.mxu0 0.0
    %47 = vmatpush1.msra.mxu0 0.0
    %48 = vmatprep.subr.mxu0 0.0
    %49 = vmatpush1.msra.mxu0 0.0
    %50 = vmatprep.subr.mxu0 0.0
    %51 = vmatpush1.msra.mxu0 0.0
    %52 = vmatprep.subr.mxu0 0.0
    %53 = vmatpush1.msra.mxu0 %v16
    %54 = vmatprep.subr.mxu0 0.0
    %55 = vmatpush2.msra.mxu0 0.0
    %56 = vmatprep.subr.mxu0 0.0
    %57 = vmatpush2.msra.mxu0 0.0
    %58 = vmatprep.subr.mxu0 0.0
    %59 = vmatpush2.msra.mxu0 0.0
    %60 = vmatprep.subr.mxu0 0.0
    %61 = vmatpush2.msra.mxu0 0.0
    %62 = vmatprep.subr.mxu0 0.0
    %63 = vmatpush2.msra.mxu0 0.0
    %64 = vmatprep.subr.mxu0 0.0
    %65 = vmatpush2.msra.mxu0 0.0
    %66 = vmatprep.subr.mxu0 0.0
    %67 = vmatpush2.msra.mxu0 0.0
    %68 = vmatprep.subr.mxu0 0.0
    %69 = vmatpush2.msra.mxu0 0.0
    %70 = vmatprep.subr.mxu0 0.0
    %71 = vmatpush2.msra.mxu0 0.0
    %72 = vmatprep.subr.mxu0 0.0
    %73 = vmatpush2.msra.mxu0 0.0
    %74 = vmatprep.subr.mxu0 0.0
    %75 = vmatpush2.msra.mxu0 0.0
    %76 = vmatprep.subr.mxu0 0.0
    %77 = vmatpush2.msra.mxu0 0.0
    %78 = vmatprep.subr.mxu0 0.0
    %79 = vmatpush2.msra.mxu0 0.0
    %80 = vmatprep.subr.mxu0 0.0
    %81 = vmatpush2.msra.mxu0 0.0
    %82 = vmatprep.subr.mxu0 0.0
    %83 = vmatpush2.msra.mxu0 0.0
    %84 = vmatprep.subr.mxu0 0.0
    %85 = vmatpush2.msra.mxu0 0.0
    %86 = vmatprep.mubr.f32.mxu0 0.0
    %87 = vmatmul.mubr.f32.gmra.mxu0 %v20
    %v88 = vpop.f32.mrf.mxu0
    %v89 = vadd.f32 %v17, %v88
    %v90 = vpop.f32.mrf.mxu0
    %91 = vdwg.mxu0
    %v92 = vtanh.pop %v89
    %vm93 = vcmask 24576
    %94 = vst.msk [vmem:[#allocation2] sm:$0x1] %vm93, %v92
    // Predicated region
    $region14: #{tpu_custom_call.1} parent=1 // pred_check
      _
    $region15: #{tpu_custom_call.1} parent=1 // pred_check_branch
      %96 = sbr.rel (0) target = $region17
    $region16: #{tpu_custom_call.1} parent=1 // pred_region
      %s98 = ssub.s32 16, 16
      %99 = vsyncadd [#allocation3], %s98
      %s101 = sshll.u32 [#allocation2], 4
      %s102 = int_to_ptr.vmem [resolvable:$true] %s101
      %104 = dma.vmem_to_hbm [thread:$0]  %s102, 16, %s3, [#allocation3]
    $region17: #{tpu_custom_call.1} parent=1 // pred_fallthru
      _
    // Predicated region
    $region18: #{tpu_custom_call.1} parent=1 // pred_check
      _
    $region19: #{tpu_custom_call.1} parent=1 // pred_check_branch
      %106 = sbr.rel (0) target = $region21
    $region20: #{tpu_custom_call.1} parent=1 // pred_region
      %107 = dma.done [#allocation3], 16
    $region21: #{tpu_custom_call.1} parent=1 // pred_fallthru
      _
    %108 = vsyncpa [#allocation3], 1

</llo_original>
